<compile_context>
chip_gen: v6e
topology: v6e:2x2x1
jax: 0.10.0
libtpu: 0.0.40
codegen_flags: <defaults>
</compile_context>

<pallas_src>
import numpy as np
import jax
import jax.numpy as jnp
from jax.experimental import pallas as pl
from jax.experimental.pallas import tpu as pltpu


def _round_up(x, m):
    return (x + m - 1) // m * m


def _cylinder_l1_kernel(sender_ref, recv_ref, dist_ref, out_ref):
    # sender_ref: (TB, Fin) float   -- column 0 holds the color id (stored as float)
    # recv_ref  : (TB, N)   float   -- receiver logits (input dtype; upcast here)
    # dist_ref  : (C,  N)   float32 -- resident distance matrix
    # out_ref   : (TB, 2)   float32 -- [:, 0] expectation, [:, 1] acc
    logits = recv_ref[...].astype(jnp.float32)                       # (TB, N)
    # round-to-nearest before the int cast (robust to 4.9999995-style float ids;
    # identical to torch's .long() for exactly-integer ids).
    cid = jnp.round(sender_ref[:, 0:1].astype(jnp.float32)).astype(jnp.int32)  # (TB, 1)
    TB, N = logits.shape
    C = dist_ref.shape[0]

    # Single row-max, reused by both the softmax and the argmax path.
    mx = jnp.max(logits, axis=-1, keepdims=True)                     # (TB, 1)
    ex = jnp.exp(logits - mx)                                        # (TB, N)

    # Gather distance rows via a one-hot matmul on the MXU (f32 accumulate).
    # Exact: each one-hot row has a single 1.0, so no accumulation rounding.
    col_iota = jax.lax.broadcasted_iota(jnp.int32, (TB, C), 1)
    onehot = (col_iota == cid).astype(dist_ref.dtype)                # (TB, C)
    distances = jnp.dot(onehot, dist_ref[...],
                        preferred_element_type=jnp.float32)          # (TB, N)

    # expectation = sum_n dist[id, n] * softmax(logits)[n]
    # (normalization fused; exact division — kernel is DMA-bound, so it's free)
    num = jnp.sum(distances * ex, axis=-1, keepdims=True)            # (TB, 1)
    den = jnp.sum(ex, axis=-1, keepdims=True)                        # (TB, 1)
    expectation = num / den                                          # (TB, 1)

    # acc = (argmax(logits, dim=1) == color_id); first-occurrence tie-break.
    lane_iota = jax.lax.broadcasted_iota(jnp.int32, (TB, N), 1)
    argmax_idx = jnp.min(jnp.where(logits == mx, lane_iota, N),
                         axis=-1, keepdims=True)                     # (TB, 1)
    acc = (argmax_idx == cid).astype(jnp.float32)                    # (TB, 1)

    # Direct column stores (no lane-axis concatenate / relayout).
    out_ref[:, 0:1] = expectation
    out_ref[:, 1:2] = acc


def _pick_block_b(B, N, itemsize):
    # ~2 MiB of logits per tile: close to HBM roofline on v5e/v6e/v7x while the
    # double-buffered input + ~4 f32-sized in-kernel temps stay well under the
    # v7x 64 MiB VMEM budget. Cap so large batches keep >= ~8 grid steps
    # (megacore sharding on v7x + pipeline depth).
    target_tile_bytes = 2 * 1024 * 1024
    tb = max(32, target_tile_bytes // max(1, N * itemsize))
    tb = min(tb, pl.cdiv(B, 8))
    return _round_up(max(tb, 1), 32)


def cylinder_l1_loss_kernel(sender_input, receiver_output, distance_matrix, *,
                            block_b=None):
    B, N = receiver_output.shape
    C = distance_matrix.shape[0]

    # Only column 0 of sender_input is consumed. When the sender payload is
    # wide, pre-slice so the unused columns are never DMA'd; narrow payloads
    # are passed straight through (no standalone XLA launches at all).
    if sender_input.ndim != 2:
        sender_input = sender_input.reshape(sender_input.shape[0], -1)
    if sender_input.shape[1] > 8:
        sender_input = sender_input[:, :1]
    Fin = sender_input.shape[1]

    # float32 distance matrix: exact for arbitrary (non-integer) distances.
    dist_f32 = distance_matrix.astype(jnp.float32)

    if block_b is None:
        block_b = _pick_block_b(B, N, receiver_output.dtype.itemsize)
    TB = _round_up(block_b, 32)
    if TB >= B:
        TB = B          # single full-extent block; no alignment requirement

    grid = (pl.cdiv(B, TB),)   # ragged last block: row-local math + masked stores

    out = pl.pallas_call(
        _cylinder_l1_kernel,
        out_shape=jax.ShapeDtypeStruct((B, 2), jnp.float32),
        grid_spec=pltpu.PrefetchScalarGridSpec(
            num_scalar_prefetch=0,
            grid=grid,
            in_specs=[
                pl.BlockSpec((TB, Fin), lambda i: (i, 0)),  # sender (col 0 = color id)
                pl.BlockSpec((TB, N), lambda i: (i, 0)),    # logits, input dtype
                pl.BlockSpec((C, N), lambda i: (0, 0)),     # resident distance matrix
            ],
            out_specs=pl.BlockSpec((TB, 2), lambda i: (i, 0)),
        ),
        compiler_params=pltpu.CompilerParams(
            dimension_semantics=("parallel",),   # shard batch tiles across TCs on v7x
            vmem_limit_bytes=48 * 1024 * 1024,   # <= v7x 64 MiB; plenty on v5e/v6e
        ),
    )(sender_input, receiver_output, dist_f32)

    return out[:, 0], out[:, 1]


# ---------------- Python-scalar diagnostics (glue, not kernel work) ----------------
# TODO(synk): H_m / I_m_inp / I_m_out are Python dict + sklearn mutual_info_score
# statistics over message argmaxes in the original module; no Pallas equivalent,
# so they stay as host-side numpy.
def compute_entropy_np(argmaxes):
    vals, counts = np.unique(np.asarray(argmaxes), return_counts=True)
    p = counts / counts.sum()
    return float(-(p * np.log(p)).sum())


def mutual_info_np(a, b):
    # Equivalent of sklearn.metrics.mutual_info_score (natural log).
    a = np.asarray(a); b = np.asarray(b)
    ua, ia = np.unique(a, return_inverse=True)
    ub, ib = np.unique(b, return_inverse=True)
    cont = np.zeros((len(ua), len(ub)), dtype=np.float64)
    np.add.at(cont, (ia, ib), 1.0)
    n = cont.sum()
    pij = cont / n
    pi = pij.sum(axis=1, keepdims=True)
    pj = pij.sum(axis=0, keepdims=True)
    mask = pij > 0
    return float((pij[mask] * np.log(pij[mask] / (pi @ pj)[mask])).sum())


def cylinder_l1_loss_forward(sender_input, message, _receiver_input,
                             receiver_output, _labels, distance_matrix, *,
                             block_b=None):
    expectation, acc = cylinder_l1_loss_kernel(
        sender_input, receiver_output, distance_matrix, block_b=block_b)
    msg_argmax = np.asarray(jnp.argmax(message, axis=-1))
    color_ids = np.asarray(jnp.round(sender_input[:, 0])).astype(np.int64)
    recv_argmax = np.asarray(jnp.argmax(receiver_output.astype(jnp.float32), axis=-1))
    H_m = compute_entropy_np(msg_argmax)
    I_m_inp = mutual_info_np(msg_argmax.tolist(), color_ids.tolist())
    I_m_out = mutual_info_np(msg_argmax.tolist(), recv_argmax.tolist())
    return expectation, {"acc": acc, "Hm": H_m, "I_m_inp": I_m_inp, "I_m_out": I_m_out}


if __name__ == "__main__":
    key = jax.random.PRNGKey(0)
    B, F, C = 48, 4, 16          # batch, sender features, number of colors (N == C)
    V = 10                       # message vocab size

    k1, k2, k3, k4 = jax.random.split(key, 4)

    # sender_input: column 0 = integer color id (stored as float, like the torch code)
    color_ids = jax.random.randint(k1, (B,), 0, C)
    sender_rest = jax.random.normal(k2, (B, F - 1), dtype=jnp.float32)
    sender_input = jnp.concatenate(
        [color_ids[:, None].astype(jnp.float32), sender_rest], axis=1)

    # Keep logits bf16 in HBM/VMEM (upcast happens inside the kernel).
    receiver_output = jax.random.normal(k3, (B, C), dtype=jnp.bfloat16)
    message = jax.random.normal(k4, (B, V), dtype=jnp.float32)

    # Deterministic cyclic ("cylinder") L1 distance matrix.
    idx = jnp.arange(C)
    diff = jnp.abs(idx[:, None] - idx[None, :])
    distance_matrix = jnp.minimum(diff, C - diff).astype(jnp.float32)

    # block_b=32 -> TB=32, grid=cdiv(48,32)=2 with a ragged last block, so the
    # pad-free tiled path is exercised even at this tiny batch.
    expectation, aux = cylinder_l1_loss_forward(
        sender_input, message, None, receiver_output, None, distance_matrix,
        block_b=32)
    jax.block_until_ready((expectation, aux["acc"]))

    # Reference check in plain JAX (same f32-upcast of the bf16 logits).
    logits_f32 = receiver_output.astype(jnp.float32)
    sm_ref = jax.nn.softmax(logits_f32, axis=-1)
    dist_rows = distance_matrix[color_ids]
    exp_ref = jnp.sum(dist_rows * sm_ref, axis=-1)
    acc_ref = (jnp.argmax(logits_f32, axis=1) == color_ids).astype(jnp.float32)

    assert np.allclose(np.asarray(expectation), np.asarray(exp_ref),
                       rtol=1e-4, atol=1e-4)
    assert np.allclose(np.asarray(aux["acc"]), np.asarray(acc_ref))

    print("KERNEL_OK")
</pallas_src>

<mosaic_0001>
module attributes {stable_mosaic.version = 11 : i64} {
  func.func @_cylinder_l1_kernel(%arg0: i32, %arg1: memref<32x4xf32, #tpu.memory_space<vmem>>, %arg2: memref<32x16xbf16, #tpu.memory_space<vmem>>, %arg3: memref<16x16xf32, #tpu.memory_space<vmem>>, %arg4: memref<32x2xf32, #tpu.memory_space<vmem>>) attributes {dimension_semantics = [#tpu.dimension_semantics<parallel>], iteration_bounds = array<i64: 2>, scalar_prefetch = 0 : i64, scratch_operands = 0 : i64, tpu.core_type = #tpu.core_type<tc>, window_params = [{transform_indices = @transform_0, window_bounds = array<i64: 32, 4>}, {transform_indices = @transform_1, window_bounds = array<i64: 32, 16>}, {pipeline_mode = #tpu.pipeline_mode<synchronous>, transform_indices = @transform_2, window_bounds = array<i64: 16, 16>}, {transform_indices = @transform_3, window_bounds = array<i64: 32, 2>}]} {
    %c0 = arith.constant 0 : index
    %c0_0 = arith.constant 0 : index
    %0 = vector.load %arg2[%c0, %c0_0] : memref<32x16xbf16, #tpu.memory_space<vmem>>, vector<32x16xbf16>
    %1 = arith.extf %0 : vector<32x16xbf16> to vector<32x16xf32>
    %c0_1 = arith.constant 0 : index
    %c0_2 = arith.constant 0 : index
    %2 = vector.load %arg1[%c0_1, %c0_2] : memref<32x4xf32, #tpu.memory_space<vmem>>, vector<32x1xf32>
    %3 = math.roundeven %2 : vector<32x1xf32>
    %4 = arith.fptosi %3 : vector<32x1xf32> to vector<32x1xi32>
    %cst = arith.constant dense<0xFF800000> : vector<32xf32>
    %5 = vector.multi_reduction <maximumf>, %1, %cst [1] : vector<32x16xf32> to vector<32xf32>
    %6 = vector.shape_cast %5 : vector<32xf32> to vector<32x1xf32>
    %7 = vector.broadcast %6 : vector<32x1xf32> to vector<32x16xf32>
    %8 = arith.subf %1, %7 : vector<32x16xf32>
    %9 = math.exp %8 : vector<32x16xf32>
    %10 = tpu.iota {dimensions = array<i32: 1>} : vector<32x16xi32>
    %11 = vector.broadcast %4 : vector<32x1xi32> to vector<32x16xi32>
    %12 = arith.cmpi eq, %10, %11 : vector<32x16xi32>
    %13 = arith.extui %12 : vector<32x16xi1> to vector<32x16xi32>
    %14 = arith.sitofp %13 : vector<32x16xi32> to vector<32x16xf32>
    %c0_3 = arith.constant 0 : index
    %c0_4 = arith.constant 0 : index
    %15 = vector.load %arg3[%c0_3, %c0_4] : memref<16x16xf32, #tpu.memory_space<vmem>>, vector<16x16xf32>
    %cst_5 = arith.constant dense<0.000000e+00> : vector<32x16xf32>
    %16 = tpu.matmul %14, %15, %cst_5 {dimension_numbers = #tpu.dot_dimension_numbers<[1], [0], [0], [1], [0, 0, 1, 1], [], []>} : vector<32x16xf32>, vector<16x16xf32>, vector<32x16xf32> -> vector<32x16xf32>
    %17 = arith.mulf %16, %9 : vector<32x16xf32>
    %cst_6 = arith.constant dense<0.000000e+00> : vector<32xf32>
    %18 = vector.multi_reduction <add>, %17, %cst_6 [1] : vector<32x16xf32> to vector<32xf32>
    %19 = vector.shape_cast %18 : vector<32xf32> to vector<32x1xf32>
    %cst_7 = arith.constant dense<0.000000e+00> : vector<32xf32>
    %20 = vector.multi_reduction <add>, %9, %cst_7 [1] : vector<32x16xf32> to vector<32xf32>
    %21 = vector.shape_cast %20 : vector<32xf32> to vector<32x1xf32>
    %22 = arith.divf %19, %21 : vector<32x1xf32>
    %23 = tpu.iota {dimensions = array<i32: 1>} : vector<32x16xi32>
    %24 = vector.broadcast %6 : vector<32x1xf32> to vector<32x16xf32>
    %25 = arith.cmpf oeq, %1, %24 : vector<32x16xf32>
    %c16_i32 = arith.constant 16 : i32
    %26 = vector.broadcast %c16_i32 : i32 to vector<32x16xi32>
    %27 = arith.select %25, %23, %26 : vector<32x16xi1>, vector<32x16xi32>
    %cst_8 = arith.constant dense<2147483647> : vector<32xi32>
    %28 = vector.multi_reduction <minsi>, %27, %cst_8 [1] : vector<32x16xi32> to vector<32xi32>
    %29 = vector.shape_cast %28 : vector<32xi32> to vector<32x1xi32>
    %30 = arith.cmpi eq, %29, %4 : vector<32x1xi32>
    %31 = arith.extui %30 : vector<32x1xi1> to vector<32x1xi32>
    %32 = arith.sitofp %31 : vector<32x1xi32> to vector<32x1xf32>
    %c0_9 = arith.constant 0 : index
    %c0_10 = arith.constant 0 : index
    %33 = vector.load %arg4[%c0_9, %c0_10] : memref<32x2xf32, #tpu.memory_space<vmem>>, vector<32x1xf32>
    tpu.vector_store %arg4[%c0_9, %c0_10], %22 {strides = array<i32>} : memref<32x2xf32, #tpu.memory_space<vmem>>, vector<32x1xf32>,
    %c0_11 = arith.constant 0 : index
    %c1 = arith.constant 1 : index
    %34 = vector.load %arg4[%c0_11, %c1] : memref<32x2xf32, #tpu.memory_space<vmem>>, vector<32x1xf32>
    tpu.vector_store %arg4[%c0_11, %c1], %32 {strides = array<i32>} : memref<32x2xf32, #tpu.memory_space<vmem>>, vector<32x1xf32>,
    return
  }
  func.func @transform_0(%arg0: i32) -> (i32, i32) {
    %c0_i32 = arith.constant 0 : i32
    %c0_i32_0 = arith.constant 0 : i32
    return %arg0, %c0_i32 : i32, i32
  }
  func.func @transform_1(%arg0: i32) -> (i32, i32) {
    %c0_i32 = arith.constant 0 : i32
    %c0_i32_0 = arith.constant 0 : i32
    return %arg0, %c0_i32 : i32, i32
  }
  func.func @transform_2(%arg0: i32) -> (i32, i32) {
    %c0_i32 = arith.constant 0 : i32
    %c0_i32_0 = arith.constant 0 : i32
    %c0_i32_1 = arith.constant 0 : i32
    return %c0_i32, %c0_i32_0 : i32, i32
  }
  func.func @transform_3(%arg0: i32) -> (i32, i32) {
    %c0_i32 = arith.constant 0 : i32
    %c0_i32_0 = arith.constant 0 : i32
    return %arg0, %c0_i32 : i32, i32
  }
}

</mosaic_0001>

<llo_original>
// kernel: tpu_custom_call.1
$region0: #{tpu_custom_call.1}
  #allocation0 [shape = 'u32[]', space=smem, size = 0x4, offset = 0x4, fixed_abs, tag = 'smem constant byte address 0x4 - core index']
  #allocation1 [shape = 'u32[144,128]{1,0:T(1,128)}', space=vmem, size = 0x12000, scoped, tag = 'internal scratch']
  %s0 = inlined_call_operand.vmem [shape: f32[48,4], index: 0, kind: input, shape index: {}]
  %s1 = inlined_call_operand.vmem [shape: bf16[48,16], index: 1, kind: input, shape index: {}]
  %s2 = inlined_call_operand.vmem [shape: f32[16,16], index: 2, kind: input, shape index: {}]
  %s3 = inlined_call_operand.vmem [shape: f32[48,2], index: 3, kind: output, shape index: {}]
  %s4 = sld [smem:[#allocation0]]
  $region93: #{tpu_custom_call.1} parent=0
    _
  %s6 = ssub.s32 1, %s4
  %s7 = scalar_select 0, %s6, %s4
  $region1: #{tpu_custom_call.1} parent=0
    #allocation2 [shape = 'u8[32768]{0}', space=vmem, size = 0x8000, scoped, tag = 'output window, operand 0']
    loop: start=0, step=1, limit=4
    $region2: #{tpu_custom_call.1} parent=1 // loop_pre_header
      _
    $region3: #{tpu_custom_call.1} parent=1 // loop_header
      %s9 = sphi 0, %s13
      %p10 = scmp.ge.s32.totalorder %s9, 4
      %s19 = sphi 0, %s21
      %s22 = sphi 0, %s19
      %s23 = sphi 0, %s22
      %s39 = sphi 0, %s23
      %s45 = sphi 0, %s47
      %s48 = sphi 0, %s45
      %s49 = sphi 0, %s48
      %s65 = sphi 0, %s49
      %s69 = sphi 0, %s69
      %s71 = sphi 0, %s69
      %s72 = sphi 0, %s71
      %s86 = sphi 0, %s72
      %s92 = sphi 0, %s94
      %s95 = sphi 0, %s92
      %s96 = sphi 0, %s95
      %s112 = sphi 0, %s96
    $region4: #{tpu_custom_call.1} parent=1 // loop_header_branch
      %12 = sbr.rel (%p10) target = $region8
    $region5: #{tpu_custom_call.1} parent=1 // loop_body
      %s14 = ssub.s32 %s9, 1
      %s15 = ssub.s32 %s9, 2
      %s16 = sadd.s32 %s9, 1
      %s17 = ssub.s32 %s9, %s16
      %p18 = scmp.eq.s32.totalorder %s17, 0
      %s20 = sadd.s32 %s19, 1
      %s21 = scalar_select %p18, %s19, %s20
      %p24 = pneg %p18
      %p25 = scmp.eq.s32.totalorder %s9, 1
      %p26 = por %p24, %p25
      %p27 = scmp.ne.s32.totalorder %s19, %s22
      %p28 = scmp.eq.s32.totalorder %s9, 0
      %p29 = por %p27, %p28
      %p30 = scmp.ne.s32.totalorder %s19, %s22
      %p31 = scmp.eq.s32.totalorder %s14, 1
      %p32 = por %p30, %p31
      %p33 = scmp.ne.s32.totalorder %s22, %s23
      %p34 = scmp.eq.s32.totalorder %s14, 0
      %p35 = por %p33, %p34
      %p36 = scmp.ne.s32.totalorder %s22, %s23
      %p37 = scmp.eq.s32.totalorder %s15, 1
      %p38 = por %p36, %p37
      %p40 = scmp.ne.s32.totalorder %s23, %s39
      %p41 = scmp.eq.s32.totalorder %s15, 0
      %p42 = por %p40, %p41
      %s43 = ssub.s32 %s9, %s16
      %p44 = scmp.eq.s32.totalorder %s43, 0
      %s46 = sadd.s32 %s45, 1
      %s47 = scalar_select %p44, %s45, %s46
      %p50 = pneg %p44
      %p51 = scmp.eq.s32.totalorder %s9, 1
      %p52 = por %p50, %p51
      %p53 = scmp.ne.s32.totalorder %s45, %s48
      %p54 = scmp.eq.s32.totalorder %s9, 0
      %p55 = por %p53, %p54
      %p56 = scmp.ne.s32.totalorder %s45, %s48
      %p57 = scmp.eq.s32.totalorder %s14, 1
      %p58 = por %p56, %p57
      %p59 = scmp.ne.s32.totalorder %s48, %s49
      %p60 = scmp.eq.s32.totalorder %s14, 0
      %p61 = por %p59, %p60
      %p62 = scmp.ne.s32.totalorder %s48, %s49
      %p63 = scmp.eq.s32.totalorder %s15, 1
      %p64 = por %p62, %p63
      %p66 = scmp.ne.s32.totalorder %s49, %s65
      %p67 = scmp.eq.s32.totalorder %s15, 0
      %p68 = por %p66, %p67
      %s70 = sadd.s32 %s69, 1
      %p73 = scmp.eq.s32.totalorder %s9, 1
      %p74 = scmp.ne.s32.totalorder %s69, %s71
      %p75 = scmp.eq.s32.totalorder %s9, 0
      %p76 = por %p74, %p75
      %p77 = scmp.ne.s32.totalorder %s69, %s71
      %p78 = scmp.eq.s32.totalorder %s14, 1
      %p79 = por %p77, %p78
      %p80 = scmp.ne.s32.totalorder %s71, %s72
      %p81 = scmp.eq.s32.totalorder %s14, 0
      %p82 = por %p80, %p81
      %p83 = scmp.ne.s32.totalorder %s71, %s72
      %p84 = scmp.eq.s32.totalorder %s15, 1
      %p85 = por %p83, %p84
      %p87 = scmp.ne.s32.totalorder %s72, %s86
      %p88 = scmp.eq.s32.totalorder %s15, 0
      %p89 = por %p87, %p88
      %s90 = ssub.s32 %s9, %s16
      %p91 = scmp.eq.s32.totalorder %s90, 0
      %s93 = sadd.s32 %s92, 1
      %s94 = scalar_select %p91, %s92, %s93
      %p97 = pneg %p91
      %p98 = scmp.eq.s32.totalorder %s9, 1
      %p99 = por %p97, %p98
      %p100 = scmp.ne.s32.totalorder %s92, %s95
      %p101 = scmp.eq.s32.totalorder %s9, 0
      %p102 = por %p100, %p101
      %p103 = scmp.ne.s32.totalorder %s92, %s95
      %p104 = scmp.eq.s32.totalorder %s14, 1
      %p105 = por %p103, %p104
      %p106 = scmp.ne.s32.totalorder %s95, %s96
      %p107 = scmp.eq.s32.totalorder %s14, 0
      %p108 = por %p106, %p107
      %p109 = scmp.ne.s32.totalorder %s95, %s96
      %p110 = scmp.eq.s32.totalorder %s15, 1
      %p111 = por %p109, %p110
      %p113 = scmp.ne.s32.totalorder %s96, %s112
      %p114 = scmp.eq.s32.totalorder %s15, 0
      %p115 = por %p113, %p114
      %p116 = scmp.le.s32.totalorder 1, %s9
      %p117 = scmp.lt.s32.totalorder %s9, 3
      %p118 = pnand %p116, %p117
      %p119 = pneg %p118
      // Predicated region
      $region9: #{tpu_custom_call.1} parent=5 // pred_check
        _
      $region10: #{tpu_custom_call.1} parent=5 // pred_check_branch
        %121 = sbr.rel (%p118) target = $region12
      $region11: #{tpu_custom_call.1} parent=5 // pred_region
        %s122 = ssub.s32 %s9, 1
        // Predicated region
        $region13: #{tpu_custom_call.1} parent=11 // pred_check
          %p123 = pneg %p82
        $region14: #{tpu_custom_call.1} parent=11 // pred_check_branch
          %125 = sbr.rel (%p123) target = $region16
        $region15: #{tpu_custom_call.1} parent=11 // pred_region
          _
        $region16: #{tpu_custom_call.1} parent=11 // pred_fallthru
          _
      $region12: #{tpu_custom_call.1} parent=5 // pred_fallthru
        _
      %p126 = scmp.lt.s32.totalorder %s9, 2
      // Predicated region
      $region17: #{tpu_custom_call.1} parent=5 // pred_check
        %p127 = pneg %p126
      $region18: #{tpu_custom_call.1} parent=5 // pred_check_branch
        %129 = sbr.rel (%p127) target = $region20
      $region19: #{tpu_custom_call.1} parent=5 // pred_region
        // Predicated region
        $region21: #{tpu_custom_call.1} parent=19 // pred_check
          %p130 = pneg %p29
        $region22: #{tpu_custom_call.1} parent=19 // pred_check_branch
          %132 = sbr.rel (%p130) target = $region24
        $region23: #{tpu_custom_call.1} parent=19 // pred_region
          %s133 = smul.u32 4, %s9
          %s134 = ssub.s32 6, %s133
          %p135 = scmp.lt.s32.totalorder %s134, 4
          %s136 = scalar_select %p135, %s134, 4
          %s137 = smul.u32 128, %s136
          %p138 = scmp.lt.s32.totalorder %s133, 5
          %s139 = scalar_select %p138, %s133, 5
          %s140 = smul.addr %s139, 8
          %s141 = scalar_lea.vmem %s0, %s140
          %s142 = smul.u32 4, %s9
          %s143 = ssub.s32 6, %s142
          %p144 = scmp.lt.s32.totalorder %s143, 4
          %s145 = scalar_select %p144, %s143, 4
          %s146 = smul.u32 128, %s145
        $region24: #{tpu_custom_call.1} parent=19 // pred_fallthru
          _
        // Predicated region
        $region25: #{tpu_custom_call.1} parent=19 // pred_check
          %p147 = pneg %p55
        $region26: #{tpu_custom_call.1} parent=19 // pred_check_branch
          %149 = sbr.rel (%p147) target = $region28
        $region27: #{tpu_custom_call.1} parent=19 // pred_region
          %s150 = smul.u32 4, %s9
          %s151 = ssub.s32 6, %s150
          %p152 = scmp.lt.s32.totalorder %s151, 4
          %s153 = scalar_select %p152, %s151, 4
          %s154 = smul.u32 64, %s153
          %p155 = scmp.lt.s32.totalorder %s150, 5
          %s156 = scalar_select %p155, %s150, 5
          %s157 = smul.addr %s156, 4
          %s158 = scalar_lea.vmem %s1, %s157
          %s159 = smul.u32 4, %s9
          %s160 = ssub.s32 6, %s159
          %p161 = scmp.lt.s32.totalorder %s160, 4
          %s162 = scalar_select %p161, %s160, 4
          %s163 = smul.u32 64, %s162
        $region28: #{tpu_custom_call.1} parent=19 // pred_fallthru
          _
      $region20: #{tpu_custom_call.1} parent=5 // pred_fallthru
        _
      %p164 = scmp.le.s32.totalorder 1, %s9
      %p165 = scmp.lt.s32.totalorder %s9, 3
      %p166 = pnand %p164, %p165
      %p167 = pneg %p166
      // Predicated region
      $region29: #{tpu_custom_call.1} parent=5 // pred_check
        _
      $region30: #{tpu_custom_call.1} parent=5 // pred_check_branch
        %169 = sbr.rel (%p166) target = $region32
      $region31: #{tpu_custom_call.1} parent=5 // pred_region
        %s170 = ssub.s32 %s9, 1
        %s171 = smul.u32 4, %s14
        %s172 = ssub.s32 6, %s171
        %p173 = scmp.lt.s32.totalorder %s172, 4
        %s174 = scalar_select %p173, %s172, 4
        %s175 = smul.u32 128, %s174
        %p176 = scmp.lt.s32.totalorder %s171, 5
        %s177 = scalar_select %p176, %s171, 5
        %s178 = smul.addr %s177, 8
        %s179 = scalar_lea.vmem %s0, %s178
        %p180 = pneg %p35
        %p181 = pneg %p32
        %s182 = smul.u32 4, %s14
        %s183 = ssub.s32 6, %s182
        %p184 = scmp.lt.s32.totalorder %s183, 4
        %s185 = scalar_select %p184, %s183, 4
        %s186 = smul.u32 64, %s185
        %p187 = scmp.lt.s32.totalorder %s182, 5
        %s188 = scalar_select %p187, %s182, 5
        %s189 = smul.addr %s188, 4
        %s190 = scalar_lea.vmem %s1, %s189
        %p191 = pneg %p61
        %p192 = pneg %p58
        %p193 = pneg %p82
        %p194 = pneg %p79
        %p195 = pneg %p108
        %p196 = pneg %p105
        %s197 = sand.u32 %s95, 1
        %s198 = sand.u32 %s95, 1
        %s199 = smul.addr %s198, 32
        %s200 = scalar_lea.vmem [#allocation2], %s199
        %s201 = smul.u32 4, %s14
        %s202 = ssub.s32 6, %s201
        %p203 = scmp.lt.s32.totalorder %s202, 4
        %s204 = scalar_select %p203, %s202, 4
        %s205 = smul.u32 128, %s204
        %p206 = scmp.lt.s32.totalorder %s201, 5
        %s207 = scalar_select %p206, %s201, 5
        %s208 = smul.addr %s207, 8
        %s209 = scalar_lea.vmem %s0, %s208
        %s210 = smul.u32 4, %s14
        %s211 = ssub.s32 6, %s210
        %p212 = scmp.lt.s32.totalorder %s211, 4
        %s213 = scalar_select %p212, %s211, 4
        %s214 = smul.u32 128, %s213
        %s215 = smul.u32 4, %s14
        %s216 = ssub.s32 6, %s215
        %p217 = scmp.lt.s32.totalorder %s216, 4
        %s218 = scalar_select %p217, %s216, 4
        %s219 = smul.u32 64, %s218
        %p220 = scmp.lt.s32.totalorder %s215, 5
        %s221 = scalar_select %p220, %s215, 5
        %s222 = smul.addr %s221, 4
        %s223 = scalar_lea.vmem %s1, %s222
        %s224 = smul.u32 4, %s14
        %s225 = ssub.s32 6, %s224
        %p226 = scmp.lt.s32.totalorder %s225, 4
        %s227 = scalar_select %p226, %s225, 4
        %s228 = smul.u32 64, %s227
        %s229 = smul.u32 4, %s14
        %s230 = ssub.s32 6, %s229
        %p231 = scmp.lt.s32.totalorder %s230, 4
        %s232 = scalar_select %p231, %s230, 4
        %s233 = smul.u32 128, %s232
        %v234 = vld [vmem:[%s223] sm:$0xf]
        %v235 = vld [vmem:[%s223 + $0x4] sm:$0xf]
        %v236 = vld [vmem:[%s223 + $0x8] sm:$0xf]
        %v237 = vld [vmem:[%s223 + $0xc] sm:$0xf]
        %v238 = vunpack.c.l.bf16 %v234
        %v239 = vunpack.c.l.bf16 %v235
        %v240 = vunpack.c.l.bf16 %v236
        %v241 = vunpack.c.l.bf16 %v237
        %v242 = vld [vmem:[%s209] sm:$0xff]
        %v243 = vld [vmem:[%s209 + $0x8] sm:$0xff]
        %v244 = vld [vmem:[%s209 + $0x10] sm:$0xff]
        %v245 = vld [vmem:[%s209 + $0x18] sm:$0xff]
        %v246 = vcvt.f32.s32.ties.to.even %v242
        %v247 = vcvt.f32.s32.ties.to.even %v243
        %v248 = vcvt.f32.s32.ties.to.even %v244
        %v249 = vcvt.f32.s32.ties.to.even %v245
        %vm250 = vcmask 130048
        %v251 = vsel %vm250, %v238, -inf
        %252 = vmax.xlane.f32.xlu0 %v251
        %v253 = vpop.xlane.xlu0 %252
        %v254 = vsel %vm250, %v239, -inf
        %255 = vmax.xlane.f32.xlu0 %v254
        %v256 = vpop.xlane.xlu0 %255
        %v257 = vsel %vm250, %v240, -inf
        %258 = vmax.xlane.f32.xlu0 %v257
        %v259 = vpop.xlane.xlu0 %258
        %v260 = vsel %vm250, %v241, -inf
        %261 = vmax.xlane.f32.xlu0 %v260
        %v262 = vpop.xlane.xlu0 %261
        %v263 = vsub.f32 %v238, %v253
        %v264 = vsub.f32 %v239, %v256
        %v265 = vsub.f32 %v240, %v259
        %v266 = vsub.f32 %v241, %v262
        %v267 = vmul.f32 %v263, 1.442695
        %v268 = vpow.pop %v267
        %v269 = vmul.f32 %v264, 1.442695
        %v270 = vpow.pop %v269
        %v271 = vmul.f32 %v265, 1.442695
        %v272 = vpow.pop %v271
        %v273 = vmul.f32 %v266, 1.442695
        %v274 = vpow.pop %v273
        %v275 = vlaneseq
        %v276 = vand.u32 %v275, 127
        %277 = vset.pattern.permute.xlu0 0
        %278 = vperm.xlu0 %277, %v246
        %v279 = vpop.permute.xlu0 %278
        %280 = vset.pattern.permute.xlu0 0
        %281 = vperm.xlu0 %280, %v247
        %v282 = vpop.permute.xlu0 %281
        %283 = vset.pattern.permute.xlu0 0
        %284 = vperm.xlu0 %283, %v248
        %v285 = vpop.permute.xlu0 %284
        %286 = vset.pattern.permute.xlu0 0
        %287 = vperm.xlu0 %286, %v249
        %v288 = vpop.permute.xlu0 %287
        %vm289 = vcmp.eq.s32.totalorder %v276, %v279
        %vm290 = vcmp.eq.s32.totalorder %v276, %v282
        %vm291 = vcmp.eq.s32.totalorder %v276, %v285
        %vm292 = vcmp.eq.s32.totalorder %v276, %v288
        %v293 = vsel %vm289, 1, 0
        %v294 = vsel %vm290, 1, 0
        %v295 = vsel %vm291, 1, 0
        %v296 = vsel %vm292, 1, 0
        %v297 = vcvt.s32.f32 %v293
        %v298 = vcvt.s32.f32 %v294
        %v299 = vcvt.s32.f32 %v295
        %v300 = vcvt.s32.f32 %v296
        %v301 = vld [vmem:[%s2] sm:$0xff]
        %v302 = vld [vmem:[%s2 + $0x8] sm:$0xff]
        %v304 = vsel %vm250, %v297, 0
        %v307 = vsel %vm250, %v298, 0
        %v310 = vsel %vm250, %v299, 0
        %v313 = vsel %vm250, %v300, 0
        %315 = vmatprep.subr.mxu0 0.0
        %316 = vmatpush1.msra.mxu0 0.0
        %317 = vmatprep.subr.mxu0 0.0
        %318 = vmatpush1.msra.mxu0 0.0
        %319 = vmatprep.subr.mxu0 0.0
        %320 = vmatpush1.msra.mxu0 0.0
        %321 = vmatprep.subr.mxu0 0.0
        %322 = vmatpush1.msra.mxu0 0.0
        %323 = vmatprep.subr.mxu0 0.0
        %324 = vmatpush1.msra.mxu0 0.0
        %325 = vmatprep.subr.mxu0 0.0
        %326 = vmatpush1.msra.mxu0 0.0
        %327 = vmatprep.subr.mxu0 0.0
        %328 = vmatpush1.msra.mxu0 0.0
        %329 = vmatprep.subr.mxu0 0.0
        %330 = vmatpush1.msra.mxu0 0.0
        %331 = vmatprep.subr.mxu0 0.0
        %332 = vmatpush1.msra.mxu0 0.0
        %333 = vmatprep.subr.mxu0 0.0
        %334 = vmatpush1.msra.mxu0 0.0
        %335 = vmatprep.subr.mxu0 0.0
        %336 = vmatpush1.msra.mxu0 0.0
        %337 = vmatprep.subr.mxu0 0.0
        %338 = vmatpush1.msra.mxu0 0.0
        %339 = vmatprep.subr.mxu0 0.0
        %340 = vmatpush1.msra.mxu0 0.0
        %341 = vmatprep.subr.mxu0 0.0
        %342 = vmatpush1.msra.mxu0 0.0
        %343 = vmatprep.subr.mxu0 0.0
        %344 = vmatpush1.msra.mxu0 %v302
        %345 = vmatprep.subr.mxu0 0.0
        %346 = vmatpush1.msra.mxu0 %v301
        %347 = vmatprep.subr.mxu0 0.0
        %348 = vmatpush2.msra.mxu0 0.0
        %349 = vmatprep.subr.mxu0 0.0
        %350 = vmatpush2.msra.mxu0 0.0
        %351 = vmatprep.subr.mxu0 0.0
        %352 = vmatpush2.msra.mxu0 0.0
        %353 = vmatprep.subr.mxu0 0.0
        %354 = vmatpush2.msra.mxu0 0.0
        %355 = vmatprep.subr.mxu0 0.0
        %356 = vmatpush2.msra.mxu0 0.0
        %357 = vmatprep.subr.mxu0 0.0
        %358 = vmatpush2.msra.mxu0 0.0
        %359 = vmatprep.subr.mxu0 0.0
        %360 = vmatpush2.msra.mxu0 0.0
        %361 = vmatprep.subr.mxu0 0.0
        %362 = vmatpush2.msra.mxu0 0.0
        %363 = vmatprep.subr.mxu0 0.0
        %364 = vmatpush2.msra.mxu0 0.0
        %365 = vmatprep.subr.mxu0 0.0
        %366 = vmatpush2.msra.mxu0 0.0
        %367 = vmatprep.subr.mxu0 0.0
        %368 = vmatpush2.msra.mxu0 0.0
        %369 = vmatprep.subr.mxu0 0.0
        %370 = vmatpush2.msra.mxu0 0.0
        %371 = vmatprep.subr.mxu0 0.0
        %372 = vmatpush2.msra.mxu0 0.0
        %373 = vmatprep.subr.mxu0 0.0
        %374 = vmatpush2.msra.mxu0 0.0
        %375 = vmatprep.subr.mxu0 0.0
        %376 = vmatpush2.msra.mxu0 0.0
        %377 = vmatprep.subr.mxu0 0.0
        %378 = vmatpush2.msra.mxu0 0.0
        %379 = vmatprep.mubr.f32.mxu0 0.0
        %380 = vmatmul.mubr.f32.gmra.mxu0 %v304
        %v381 = vpop.f32.mrf.mxu0
        %v382 = vadd.f32 0.0, %v381
        %v383 = vpop.f32.mrf.mxu0
        %384 = vmatprep.mubr.f32.mxu0 0.0
        %385 = vmatmul.mubr.f32.gmra.mxu0 %v307
        %v386 = vpop.f32.mrf.mxu0
        %v387 = vadd.f32 0.0, %v386
        %v388 = vpop.f32.mrf.mxu0
        %389 = vmatprep.mubr.f32.mxu0 0.0
        %390 = vmatmul.mubr.f32.gmra.mxu0 %v310
        %v391 = vpop.f32.mrf.mxu0
        %v392 = vadd.f32 0.0, %v391
        %v393 = vpop.f32.mrf.mxu0
        %394 = vmatprep.mubr.f32.mxu0 0.0
        %395 = vmatmul.mubr.f32.gmra.mxu0 %v313
        %v396 = vpop.f32.mrf.mxu0
        %v397 = vadd.f32 0.0, %v396
        %v398 = vpop.f32.mrf.mxu0
        %399 = vdwg.mxu0
        %v400 = vmul.f32 %v382, %v268
        %v401 = vmul.f32 %v387, %v270
        %v402 = vmul.f32 %v392, %v272
        %v403 = vmul.f32 %v397, %v274
        %v404 = vsel %vm250, %v400, 0.0
        %405 = vadd.xlane.f32.xlu0 %v404
        %v406 = vpop.xlane.xlu0 %405
        %v407 = vsel %vm250, %v401, 0.0
        %408 = vadd.xlane.f32.xlu0 %v407
        %v409 = vpop.xlane.xlu0 %408
        %v410 = vsel %vm250, %v402, 0.0
        %411 = vadd.xlane.f32.xlu0 %v410
        %v412 = vpop.xlane.xlu0 %411
        %v413 = vsel %vm250, %v403, 0.0
        %414 = vadd.xlane.f32.xlu0 %v413
        %v415 = vpop.xlane.xlu0 %414
        %v416 = vsel %vm250, %v268, 0.0
        %417 = vadd.xlane.f32.xlu0 %v416
        %v418 = vpop.xlane.xlu0 %417
        %v419 = vsel %vm250, %v270, 0.0
        %420 = vadd.xlane.f32.xlu0 %v419
        %v421 = vpop.xlane.xlu0 %420
        %v422 = vsel %vm250, %v272, 0.0
        %423 = vadd.xlane.f32.xlu0 %v422
        %v424 = vpop.xlane.xlu0 %423
        %v425 = vsel %vm250, %v274, 0.0
        %426 = vadd.xlane.f32.xlu0 %v425
        %v427 = vpop.xlane.xlu0 %426
        %v428 = vrcp.pop %v418
        %v429 = vmul.f32 %v406, %v428
        %v430 = vrcp.pop %v421
        %v431 = vmul.f32 %v409, %v430
        %v432 = vrcp.pop %v424
        %v433 = vmul.f32 %v412, %v432
        %v434 = vrcp.pop %v427
        %v435 = vmul.f32 %v415, %v434
        %vm436 = vcmp.eq.f32.partialorder %v238, %v253
        %vm437 = vcmp.eq.f32.partialorder %v239, %v256
        %vm438 = vcmp.eq.f32.partialorder %v240, %v259
        %vm439 = vcmp.eq.f32.partialorder %v241, %v262
        %v440 = vsel %vm436, %v276, 16
        %v441 = vsel %vm437, %v276, 16
        %v442 = vsel %vm438, %v276, 16
        %v443 = vsel %vm439, %v276, 16
        %v444 = vsel %vm250, %v440, 2147483647
        %v445 = vand.u32 %v444, 65535
        %v446 = vshra.s32 %v444, 16
        %v447 = vcvt.s32.f32 %v445
        %v448 = vcvt.s32.f32 %v446
        %449 = vmin.xlane.f32.xlu0 %v448
        %v450 = vpop.xlane.xlu0 %449
        %vm451 = vcmp.eq.f32.partialorder %v448, %v450
        %v452 = vsel %vm451, %v447, inf
        %453 = vmin.xlane.f32.xlu0 %v452
        %v454 = vpop.xlane.xlu0 %453
        %v455 = vcvt.f32.s32 %v454
        %v456 = vcvt.f32.s32 %v450
        %v457 = vshll.u32 %v456, 16
        %v458 = vadd.s32 %v457, %v455
        %v459 = vsel %vm250, %v441, 2147483647
        %v460 = vand.u32 %v459, 65535
        %v461 = vshra.s32 %v459, 16
        %v462 = vcvt.s32.f32 %v460
        %v463 = vcvt.s32.f32 %v461
        %464 = vmin.xlane.f32.xlu0 %v463
        %v465 = vpop.xlane.xlu0 %464
        %vm466 = vcmp.eq.f32.partialorder %v463, %v465
        %v467 = vsel %vm466, %v462, inf
        %468 = vmin.xlane.f32.xlu0 %v467
        %v469 = vpop.xlane.xlu0 %468
        %v470 = vcvt.f32.s32 %v469
        %v471 = vcvt.f32.s32 %v465
        %v472 = vshll.u32 %v471, 16
        %v473 = vadd.s32 %v472, %v470
        %v474 = vsel %vm250, %v442, 2147483647
        %v475 = vand.u32 %v474, 65535
        %v476 = vshra.s32 %v474, 16
        %v477 = vcvt.s32.f32 %v475
        %v478 = vcvt.s32.f32 %v476
        %479 = vmin.xlane.f32.xlu0 %v478
        %v480 = vpop.xlane.xlu0 %479
        %vm481 = vcmp.eq.f32.partialorder %v478, %v480
        %v482 = vsel %vm481, %v477, inf
        %483 = vmin.xlane.f32.xlu0 %v482
        %v484 = vpop.xlane.xlu0 %483
        %v485 = vcvt.f32.s32 %v484
        %v486 = vcvt.f32.s32 %v480
        %v487 = vshll.u32 %v486, 16
        %v488 = vadd.s32 %v487, %v485
        %v489 = vsel %vm250, %v443, 2147483647
        %v490 = vand.u32 %v489, 65535
        %v491 = vshra.s32 %v489, 16
        %v492 = vcvt.s32.f32 %v490
        %v493 = vcvt.s32.f32 %v491
        %494 = vmin.xlane.f32.xlu0 %v493
        %v495 = vpop.xlane.xlu0 %494
        %vm496 = vcmp.eq.f32.partialorder %v493, %v495
        %v497 = vsel %vm496, %v492, inf
        %498 = vmin.xlane.f32.xlu0 %v497
        %v499 = vpop.xlane.xlu0 %498
        %v500 = vcvt.f32.s32 %v499
        %v501 = vcvt.f32.s32 %v495
        %v502 = vshll.u32 %v501, 16
        %v503 = vadd.s32 %v502, %v500
        %vm504 = vcmp.eq.s32.totalorder %v458, %v246
        %vm505 = vcmp.eq.s32.totalorder %v473, %v247
        %vm506 = vcmp.eq.s32.totalorder %v488, %v248
        %vm507 = vcmp.eq.s32.totalorder %v503, %v249
        %v508 = vsel %vm504, 1, 0
        %v509 = vsel %vm505, 1, 0
        %v510 = vsel %vm506, 1, 0
        %v511 = vsel %vm507, 1, 0
        %v512 = vcvt.s32.f32 %v508
        %v513 = vcvt.s32.f32 %v509
        %v514 = vcvt.s32.f32 %v510
        %v515 = vcvt.s32.f32 %v511
        %vm516 = vcmask 7168
        %517 = vst.msk [vmem:[%s200] sm:$0xff] %vm516, %v429
        %518 = vst.msk [vmem:[%s200 + $0x8] sm:$0xff] %vm516, %v431
        %519 = vst.msk [vmem:[%s200 + $0x10] sm:$0xff] %vm516, %v433
        %520 = vst.msk [vmem:[%s200 + $0x18] sm:$0xff] %vm516, %v435
        %525 = vrot.lane.b32.xlu0 %v512, 1
        %v526 = vpop.permute.xlu0 %525
        %527 = vrot.lane.b32.xlu0 %v513, 1
        %v528 = vpop.permute.xlu0 %527
        %529 = vrot.lane.b32.xlu0 %v514, 1
        %v530 = vpop.permute.xlu0 %529
        %531 = vrot.lane.b32.xlu0 %v515, 1
        %v532 = vpop.permute.xlu0 %531
        %vm537 = vcmask 15368
        %538 = vst.msk [vmem:[%s200] sm:$0xff] %vm537, %v526
        %539 = vst.msk [vmem:[%s200 + $0x8] sm:$0xff] %vm537, %v528
        %540 = vst.msk [vmem:[%s200 + $0x10] sm:$0xff] %vm537, %v530
        %541 = vst.msk [vmem:[%s200 + $0x18] sm:$0xff] %vm537, %v532
        %s542 = sand.u32 %s95, 1
        %s543 = sand.u32 %s95, 1
        %s544 = smul.addr %s543, 32
        %s545 = scalar_lea.vmem [#allocation2], %s544
        // Predicated region
        $region33: #{tpu_custom_call.1} parent=31 // pred_check
          %p546 = pneg %p105
        $region34: #{tpu_custom_call.1} parent=31 // pred_check_branch
          %548 = sbr.rel (%p546) target = $region36
        $region35: #{tpu_custom_call.1} parent=31 // pred_region
          %s549 = smul.u32 4, %s14
          %s550 = ssub.s32 6, %s549
          %p551 = scmp.lt.s32.totalorder %s550, 4
          %s552 = scalar_select %p551, %s550, 4
          %s553 = smul.u32 128, %s552
          %p554 = scmp.ne.s32.totalorder 0, %s553
          %s555 = smul.addr %s549, 8
          %s556 = scalar_lea.vmem %s3, %s555
          // Predicated region
          $region37: #{tpu_custom_call.1} parent=35 // pred_check
            %p557 = pneg %p554
          $region38: #{tpu_custom_call.1} parent=35 // pred_check_branch
            %559 = sbr.rel (%p557) target = $region40
          $region39: #{tpu_custom_call.1} parent=35 // pred_region
            // Predicated region
            $region41: #{tpu_custom_call.1} parent=39 // pred_check
              _
            $region42: #{tpu_custom_call.1} parent=39 // pred_check_branch
              %561 = sbr.rel (0) target = $region44
            $region43: #{tpu_custom_call.1} parent=39 // pred_region
              // Predicated region
              $region63: #{tpu_custom_call.1} parent=43 // pred_check
                _
              $region64: #{tpu_custom_call.1} parent=43 // pred_check_branch
                %617 = sbr.rel (0) target = $region66
              $region65: #{tpu_custom_call.1} parent=43 // pred_region
                %s618 = sshrl.u32 %s552, 2
                // While loop
                $region67: #{tpu_custom_call.1} parent=65 // loop_pre_header
                  _
                $region68: #{tpu_custom_call.1} parent=65 // loop_header
                  %s620 = sphi 0, %s622
                  %p621 = scmp.ge.s32.totalorder %s620, %s618
                  %s625 = sphi 0, %s638
                  %s626 = sphi %s545, %s641
                  %s627 = sphi %s556, %s642
                $region69: #{tpu_custom_call.1} parent=65 // loop_header_branch
                  %624 = sbr.rel (%p621) target = $region73
                $region70: #{tpu_custom_call.1} parent=65 // loop_body
                  %v628 = vld [vmem:[%s626] sm:$0xff]
                  %629 = vst [vmem:[%s627] sm:$0xff] %v628
                  %v630 = vld [vmem:[%s626 + $0x8] sm:$0xff]
                  %631 = vst [vmem:[%s627 + $0x8] sm:$0xff] %v630
                  %v632 = vld [vmem:[%s626 + $0x10] sm:$0xff]
                  %633 = vst [vmem:[%s627 + $0x10] sm:$0xff] %v632
                  %v634 = vld [vmem:[%s626 + $0x18] sm:$0xff]
                  %635 = vst [vmem:[%s627 + $0x18] sm:$0xff] %v634
                  %s636 = sadd.s32 1, %s625
                  %p637 = scmp.ge.s32.totalorder %s636, %s618
                  %s638 = scalar_select %p637, 0, %s636
                  %s639 = smul.u32 %s638, 32
                  %s640 = smul.u32 %s638, 32
                  %s641 = scalar_lea.vmem %s545, %s639 [#allocation2]
                  %s642 = scalar_lea.vmem %s556, %s640
                $region71: #{tpu_custom_call.1} parent=65 // loop_footer
                  %s622 = sadd.s32 %s620, 1
                $region72: #{tpu_custom_call.1} parent=65 // loop_footer_branch
                  %619 = sbr.rel target = $region68
                $region73: #{tpu_custom_call.1} parent=65 // loop_exit
                  _
                %s643 = sshrl.u32 %s552, 2
                %s644 = sand.u32 %s552, 3
                %s645 = smul.u32 %s643, 4
                %s646 = smul.u32 8, %s645
                %s647 = scalar_lea.vmem %s545, %s646 [#allocation2]
                %s648 = smul.u32 8, %s645
                %s649 = scalar_lea.vmem %s556, %s648
                // While loop
                $region74: #{tpu_custom_call.1} parent=65 // loop_pre_header
                  _
                $region75: #{tpu_custom_call.1} parent=65 // loop_header
                  %s651 = sphi 0, %s653
                  %p652 = scmp.ge.s32.totalorder %s651, %s644
                  %s656 = sphi 0, %s663
                  %s657 = sphi %s647, %s666
                  %s658 = sphi %s649, %s667
                $region76: #{tpu_custom_call.1} parent=65 // loop_header_branch
                  %655 = sbr.rel (%p652) target = $region80
                $region77: #{tpu_custom_call.1} parent=65 // loop_body
                  %v659 = vld [vmem:[%s657] sm:$0xff]
                  %660 = vst [vmem:[%s658] sm:$0xff] %v659
                  %s661 = sadd.s32 1, %s656
                  %p662 = scmp.ge.s32.totalorder %s661, %s644
                  %s663 = scalar_select %p662, 0, %s661
                  %s664 = smul.u32 %s663, 8
                  %s665 = smul.u32 %s663, 8
                  %s666 = scalar_lea.vmem %s647, %s664 [#allocation2]
                  %s667 = scalar_lea.vmem %s649, %s665
                $region78: #{tpu_custom_call.1} parent=65 // loop_footer
                  %s653 = sadd.s32 %s651, 1
                $region79: #{tpu_custom_call.1} parent=65 // loop_footer_branch
                  %650 = sbr.rel target = $region75
                $region80: #{tpu_custom_call.1} parent=65 // loop_exit
                  _
              $region66: #{tpu_custom_call.1} parent=43 // pred_fallthru
                _
              // Predicated region
              $region81: #{tpu_custom_call.1} parent=43 // pred_check
                _
              $region82: #{tpu_custom_call.1} parent=43 // pred_check_branch
                %669 = sbr.rel target = $region84
              $region83: #{tpu_custom_call.1} parent=43 // pred_region
                _
              $region84: #{tpu_custom_call.1} parent=43 // pred_fallthru
                _
            $region44: #{tpu_custom_call.1} parent=39 // pred_fallthru
              _
            // Predicated region
            $region45: #{tpu_custom_call.1} parent=39 // pred_check
              _
            $region46: #{tpu_custom_call.1} parent=39 // pred_check_branch
              %563 = sbr.rel target = $region48
            $region47: #{tpu_custom_call.1} parent=39 // pred_region
              %s565 = ssub.s32 256, 1
              %s566 = sshrl.u32 %s552, 2
              // While loop
              $region49: #{tpu_custom_call.1} parent=47 // loop_pre_header
                _
              $region50: #{tpu_custom_call.1} parent=47 // loop_header
                %s568 = sphi 0, %s570
                %p569 = scmp.ge.s32.totalorder %s568, %s566
                %s573 = sphi 0, %s586
                %s574 = sphi %s545, %s589
                %s575 = sphi %s556, %s590
              $region51: #{tpu_custom_call.1} parent=47 // loop_header_branch
                %572 = sbr.rel (%p569) target = $region55
              $region52: #{tpu_custom_call.1} parent=47 // loop_body
                %v576 = vld [vmem:[%s574] sm:%s565]
                %577 = vst [vmem:[%s575] sm:%s565] %v576
                %v578 = vld [vmem:[%s574 + $0x8] sm:%s565]
                %579 = vst [vmem:[%s575 + $0x8] sm:%s565] %v578
                %v580 = vld [vmem:[%s574 + $0x10] sm:%s565]
                %581 = vst [vmem:[%s575 + $0x10] sm:%s565] %v580
                %v582 = vld [vmem:[%s574 + $0x18] sm:%s565]
                %583 = vst [vmem:[%s575 + $0x18] sm:%s565] %v582
                %s584 = sadd.s32 1, %s573
                %p585 = scmp.ge.s32.totalorder %s584, %s566
                %s586 = scalar_select %p585, 0, %s584
                %s587 = smul.u32 %s586, 32
                %s588 = smul.u32 %s586, 32
                %s589 = scalar_lea.vmem %s545, %s587 [#allocation2]
                %s590 = scalar_lea.vmem %s556, %s588
              $region53: #{tpu_custom_call.1} parent=47 // loop_footer
                %s570 = sadd.s32 %s568, 1
              $region54: #{tpu_custom_call.1} parent=47 // loop_footer_branch
                %567 = sbr.rel target = $region50
              $region55: #{tpu_custom_call.1} parent=47 // loop_exit
                _
              %s591 = sshrl.u32 %s552, 2
              %s592 = sand.u32 %s552, 3
              %s593 = smul.u32 %s591, 4
              %s594 = smul.u32 8, %s593
              %s595 = scalar_lea.vmem %s545, %s594 [#allocation2]
              %s596 = smul.u32 8, %s593
              %s597 = scalar_lea.vmem %s556, %s596
              // While loop
              $region56: #{tpu_custom_call.1} parent=47 // loop_pre_header
                _
              $region57: #{tpu_custom_call.1} parent=47 // loop_header
                %s599 = sphi 0, %s601
                %p600 = scmp.ge.s32.totalorder %s599, %s592
                %s604 = sphi 0, %s611
                %s605 = sphi %s595, %s614
                %s606 = sphi %s597, %s615
              $region58: #{tpu_custom_call.1} parent=47 // loop_header_branch
                %603 = sbr.rel (%p600) target = $region62
              $region59: #{tpu_custom_call.1} parent=47 // loop_body
                %v607 = vld [vmem:[%s605] sm:%s565]
                %608 = vst [vmem:[%s606] sm:%s565] %v607
                %s609 = sadd.s32 1, %s604
                %p610 = scmp.ge.s32.totalorder %s609, %s592
                %s611 = scalar_select %p610, 0, %s609
                %s612 = smul.u32 %s611, 8
                %s613 = smul.u32 %s611, 8
                %s614 = scalar_lea.vmem %s595, %s612 [#allocation2]
                %s615 = scalar_lea.vmem %s597, %s613
              $region60: #{tpu_custom_call.1} parent=47 // loop_footer
                %s601 = sadd.s32 %s599, 1
              $region61: #{tpu_custom_call.1} parent=47 // loop_footer_branch
                %598 = sbr.rel target = $region57
              $region62: #{tpu_custom_call.1} parent=47 // loop_exit
                _
            $region48: #{tpu_custom_call.1} parent=39 // pred_fallthru
              _
          $region40: #{tpu_custom_call.1} parent=35 // pred_fallthru
            _
          %670 = vnop
        $region36: #{tpu_custom_call.1} parent=31 // pred_fallthru
          _
      $region32: #{tpu_custom_call.1} parent=5 // pred_fallthru
        _
      %p671 = scmp.le.s32.totalorder 2, %s9
      // Predicated region
      $region85: #{tpu_custom_call.1} parent=5 // pred_check
        %p672 = pneg %p671
      $region86: #{tpu_custom_call.1} parent=5 // pred_check_branch
        %674 = sbr.rel (%p672) target = $region88
      $region87: #{tpu_custom_call.1} parent=5 // pred_region
        %s675 = ssub.s32 %s9, 2
        // Predicated region
        $region89: #{tpu_custom_call.1} parent=87 // pred_check
          %p676 = pneg %p111
        $region90: #{tpu_custom_call.1} parent=87 // pred_check_branch
          %678 = sbr.rel (%p676) target = $region92
        $region91: #{tpu_custom_call.1} parent=87 // pred_region
          %s679 = sand.u32 %s96, 1
          %s680 = sand.u32 %s96, 1
          %s681 = smul.addr %s680, 32
          %s682 = scalar_lea.vmem [#allocation2], %s681
        $region92: #{tpu_custom_call.1} parent=87 // pred_fallthru
          _
      $region88: #{tpu_custom_call.1} parent=5 // pred_fallthru
        _
    $region6: #{tpu_custom_call.1} parent=1 // loop_footer
      %s13 = sadd.s32 1, %s9
    $region7: #{tpu_custom_call.1} parent=1 // loop_footer_branch
      %8 = sbr.rel target = $region3
    $region8: #{tpu_custom_call.1} parent=1 // loop_exit
      _

</llo_original>
